<compile_context>
chip_gen: v7x
topology: tpu7x:2x2x1
jax: 0.10.0
libtpu: 0.0.40
codegen_flags: <defaults>
</compile_context>

<pallas_src>
import functools

import jax
import jax.numpy as jnp
from jax.experimental import pallas as pl
from jax.experimental.pallas import tpu as pltpu


def _mlp_kernel(x_ref, w1_ref, b1_ref, w2_ref, b2_ref, o_ref):
    # Layer 1: x @ W1 + b1, ReLU.  MXU matmul with f32 accumulation; the LHS is
    # cast to the weight dtype (bf16 weights => bf16 MXU operands).
    x = x_ref[...]
    h = jnp.dot(x.astype(w1_ref.dtype), w1_ref[...],
                preferred_element_type=jnp.float32)
    h = jnp.maximum(h + b1_ref[...].astype(jnp.float32), 0.0)   # f32 VPU math
    # Layer 2: h @ W2 + b2.
    y = jnp.dot(h.astype(w2_ref.dtype), w2_ref[...],
                preferred_element_type=jnp.float32)
    y = y + b2_ref[...].astype(jnp.float32)
    o_ref[...] = y.astype(o_ref.dtype)


def _round_up(x, m):
    return ((x + m - 1) // m) * m


def _default_block_m():
    """256 rows on v6e/v7x (2x256x256 MXU); 128 rows on v5e (4x128x128)."""
    try:
        kind = jax.devices()[0].device_kind.lower()
    except Exception:  # pragma: no cover - be robust off-TPU
        kind = ""
    if "v5" in kind:
        return 128
    return 256


@functools.partial(jax.jit, static_argnames=("block_m", "weight_dtype"))
def fully_connected(x, w1, b1, w2, b2, *, block_m=None, weight_dtype=None):
    """x: [B, in_features]; w1: [in_features, 512]; b1: [1, 512];
       w2: [512, out_dim]; b2: [1, out_dim]  ->  [B, out_dim]"""
    B, in_features = x.shape
    hidden = w1.shape[1]
    out_dim = w2.shape[1]

    if weight_dtype is not None:
        w1 = w1.astype(weight_dtype)
        w2 = w2.astype(weight_dtype)
    # Biases stay f32 (bias-add / ReLU on the VPU in f32).
    b1 = b1.astype(jnp.float32)
    b2 = b2.astype(jnp.float32)

    # --- lane-dense output: pad out_dim up to a multiple of 128 ---
    out_pad = _round_up(max(out_dim, 128), 128)
    if out_pad != out_dim:
        w2 = jnp.pad(w2, ((0, 0), (0, out_pad - out_dim)))
        b2 = jnp.pad(b2, ((0, 0), (0, out_pad - out_dim)))

    # --- batch tiling: pad B to a multiple of the tile (tile itself is a
    #     multiple of 8 sublanes; clamp for tiny batches) ---
    if block_m is None:
        block_m = _default_block_m()
    tm = min(block_m, _round_up(B, 8))
    tm = _round_up(tm, 8)
    b_pad = _round_up(B, tm)
    if b_pad != B:
        x = jnp.pad(x, ((0, b_pad - B), (0, 0)))
    n_tiles = b_pad // tm

    itemsize = jnp.dtype(x.dtype).itemsize
    w_itemsize = jnp.dtype(w1.dtype).itemsize
    # Working set: resident weights/biases + double-buffered x/out tiles +
    # the f32 hidden/output intermediates of one tile.
    working_set = (
        (in_features * hidden + hidden * out_pad) * w_itemsize
        + (hidden + out_pad) * 4
        + 2 * tm * in_features * itemsize
        + 2 * tm * out_pad * itemsize
        + tm * (hidden + out_pad) * 4
    )
    vmem_limit = int(min(48 << 20, max(2 * working_set, 4 << 20)))

    flops = 2 * b_pad * (in_features * hidden + hidden * out_pad)
    bytes_accessed = (
        b_pad * in_features * itemsize
        + (in_features * hidden + hidden * out_pad) * w_itemsize
        + (hidden + out_pad) * 4
        + b_pad * out_pad * itemsize
    )

    out = pl.pallas_call(
        _mlp_kernel,
        out_shape=jax.ShapeDtypeStruct((b_pad, out_pad), x.dtype),
        grid=(n_tiles,),
        in_specs=[
            pl.BlockSpec((tm, in_features), lambda i: (i, 0)),      # x tile
            pl.BlockSpec((in_features, hidden), lambda i: (0, 0)),  # W1 resident
            pl.BlockSpec((1, hidden), lambda i: (0, 0)),            # b1 resident
            pl.BlockSpec((hidden, out_pad), lambda i: (0, 0)),      # W2 resident
            pl.BlockSpec((1, out_pad), lambda i: (0, 0)),           # b2 resident
        ],
        out_specs=pl.BlockSpec((tm, out_pad), lambda i: (i, 0)),
        compiler_params=pltpu.CompilerParams(
            dimension_semantics=("parallel",),
            vmem_limit_bytes=vmem_limit,
        ),
        cost_estimate=pl.CostEstimate(
            flops=flops, transcendentals=0, bytes_accessed=bytes_accessed),
    )(x, w1, b1, w2, b2)

    return out[:B, :out_dim]


def init_params(key, in_features, output_dim, hidden=512, dtype=jnp.float32):
    """Deterministic Kaiming-uniform-ish init mimicking nn.Linear defaults."""
    k1, k2, k3, k4 = jax.random.split(key, 4)
    bound1 = 1.0 / jnp.sqrt(in_features)
    bound2 = 1.0 / jnp.sqrt(hidden)
    # Stored transposed relative to PyTorch's [out, in] convention.
    w1 = jax.random.uniform(k1, (in_features, hidden), dtype, -bound1, bound1)
    b1 = jax.random.uniform(k2, (1, hidden), dtype, -bound1, bound1)
    w2 = jax.random.uniform(k3, (hidden, output_dim), dtype, -bound2, bound2)
    b2 = jax.random.uniform(k4, (1, output_dim), dtype, -bound2, bound2)
    return w1, b1, w2, b2


def _reference(x, w1, b1, w2, b2):
    return jnp.maximum(x @ w1 + b1, 0.0) @ w2 + b2


if __name__ == "__main__":
    key = jax.random.PRNGKey(0)
    kx, kx2, kp = jax.random.split(key, 3)

    in_features, output_dim = 32, 8
    w1, b1, w2, b2 = init_params(kp, in_features, output_dim)

    # --- tiny batch (module spec scale), f32 weights ---
    B = 4
    x = jax.random.normal(kx, (B, in_features), jnp.float32)
    y = jax.block_until_ready(fully_connected(x, w1, b1, w2, b2))
    ref = _reference(x, w1, b1, w2, b2)
    assert y.shape == (B, output_dim)
    assert jnp.allclose(y, ref, atol=1e-4, rtol=1e-4)

    # --- larger, non-tile-aligned batch exercising the pipelined grid ---
    B2 = 300
    x2 = jax.random.normal(kx2, (B2, in_features), jnp.float32)
    y2 = jax.block_until_ready(fully_connected(x2, w1, b1, w2, b2))
    ref2 = _reference(x2, w1, b1, w2, b2)
    assert y2.shape == (B2, output_dim)
    assert jnp.allclose(y2, ref2, atol=1e-4, rtol=1e-4)

    # --- bf16 weights on the MXU, f32 accumulation (looser tolerance) ---
    y3 = jax.block_until_ready(
        fully_connected(x2, w1, b1, w2, b2, weight_dtype=jnp.bfloat16))
    assert y3.shape == (B2, output_dim)
    assert jnp.allclose(y3, ref2, atol=5e-2, rtol=5e-2)

    print("KERNEL_OK")
</pallas_src>

<mosaic_0001>
module attributes {stable_mosaic.version = 11 : i64} {
  func.func @_mlp_kernel(%arg0: i32, %arg1: memref<8x32xf32, #tpu.memory_space<vmem>>, %arg2: memref<32x512xf32, #tpu.memory_space<vmem>>, %arg3: memref<1x512xf32, #tpu.memory_space<vmem>>, %arg4: memref<512x128xf32, #tpu.memory_space<vmem>>, %arg5: memref<1x128xf32, #tpu.memory_space<vmem>>, %arg6: memref<8x128xf32, #tpu.memory_space<vmem>>) attributes {dimension_semantics = [#tpu.dimension_semantics<parallel>], iteration_bounds = array<i64: 1>, scalar_prefetch = 0 : i64, scratch_operands = 0 : i64, tpu.core_type = #tpu.core_type<tc>, window_params = [{transform_indices = @transform_0, window_bounds = array<i64: 8, 32>}, {pipeline_mode = #tpu.pipeline_mode<synchronous>, transform_indices = @transform_1, window_bounds = array<i64: 32, 512>}, {pipeline_mode = #tpu.pipeline_mode<synchronous>, transform_indices = @transform_2, window_bounds = array<i64: 1, 512>}, {pipeline_mode = #tpu.pipeline_mode<synchronous>, transform_indices = @transform_3, window_bounds = array<i64: 512, 128>}, {pipeline_mode = #tpu.pipeline_mode<synchronous>, transform_indices = @transform_4, window_bounds = array<i64: 1, 128>}, {transform_indices = @transform_5, window_bounds = array<i64: 8, 128>}]} {
    %c0 = arith.constant 0 : index
    %c0_0 = arith.constant 0 : index
    %0 = vector.load %arg1[%c0, %c0_0] : memref<8x32xf32, #tpu.memory_space<vmem>>, vector<8x32xf32>
    %c0_1 = arith.constant 0 : index
    %c0_2 = arith.constant 0 : index
    %1 = vector.load %arg2[%c0_1, %c0_2] : memref<32x512xf32, #tpu.memory_space<vmem>>, vector<32x512xf32>
    %cst = arith.constant dense<0.000000e+00> : vector<8x512xf32>
    %2 = tpu.matmul %0, %1, %cst {dimension_numbers = #tpu.dot_dimension_numbers<[1], [0], [0], [1], [0, 0, 1, 1], [], []>} : vector<8x32xf32>, vector<32x512xf32>, vector<8x512xf32> -> vector<8x512xf32>
    %c0_3 = arith.constant 0 : index
    %c0_4 = arith.constant 0 : index
    %3 = vector.load %arg3[%c0_3, %c0_4] : memref<1x512xf32, #tpu.memory_space<vmem>>, vector<1x512xf32>
    %4 = vector.broadcast %3 : vector<1x512xf32> to vector<8x512xf32>
    %5 = arith.addf %2, %4 : vector<8x512xf32>
    %cst_5 = arith.constant 0.000000e+00 : f32
    %6 = vector.broadcast %cst_5 : f32 to vector<8x512xf32>
    %7 = arith.maximumf %5, %6 : vector<8x512xf32>
    %c0_6 = arith.constant 0 : index
    %c0_7 = arith.constant 0 : index
    %8 = vector.load %arg4[%c0_6, %c0_7] : memref<512x128xf32, #tpu.memory_space<vmem>>, vector<512x128xf32>
    %cst_8 = arith.constant dense<0.000000e+00> : vector<8x128xf32>
    %9 = tpu.matmul %7, %8, %cst_8 {dimension_numbers = #tpu.dot_dimension_numbers<[1], [0], [0], [1], [0, 0, 1, 1], [], []>} : vector<8x512xf32>, vector<512x128xf32>, vector<8x128xf32> -> vector<8x128xf32>
    %c0_9 = arith.constant 0 : index
    %c0_10 = arith.constant 0 : index
    %10 = vector.load %arg5[%c0_9, %c0_10] : memref<1x128xf32, #tpu.memory_space<vmem>>, vector<1x128xf32>
    %11 = vector.broadcast %10 : vector<1x128xf32> to vector<8x128xf32>
    %12 = arith.addf %9, %11 : vector<8x128xf32>
    %c0_11 = arith.constant 0 : index
    %c0_12 = arith.constant 0 : index
    %13 = vector.load %arg6[%c0_11, %c0_12] : memref<8x128xf32, #tpu.memory_space<vmem>>, vector<8x128xf32>
    tpu.vector_store %arg6[%c0_11, %c0_12], %12 {strides = array<i32>} : memref<8x128xf32, #tpu.memory_space<vmem>>, vector<8x128xf32>,
    return
  }
  func.func @transform_0(%arg0: i32) -> (i32, i32) {
    %c0_i32 = arith.constant 0 : i32
    %c0_i32_0 = arith.constant 0 : i32
    return %arg0, %c0_i32 : i32, i32
  }
  func.func @transform_1(%arg0: i32) -> (i32, i32) {
    %c0_i32 = arith.constant 0 : i32
    %c0_i32_0 = arith.constant 0 : i32
    %c0_i32_1 = arith.constant 0 : i32
    return %c0_i32, %c0_i32_0 : i32, i32
  }
  func.func @transform_2(%arg0: i32) -> (i32, i32) {
    %c0_i32 = arith.constant 0 : i32
    %c0_i32_0 = arith.constant 0 : i32
    %c0_i32_1 = arith.constant 0 : i32
    return %c0_i32, %c0_i32_0 : i32, i32
  }
  func.func @transform_3(%arg0: i32) -> (i32, i32) {
    %c0_i32 = arith.constant 0 : i32
    %c0_i32_0 = arith.constant 0 : i32
    %c0_i32_1 = arith.constant 0 : i32
    return %c0_i32, %c0_i32_0 : i32, i32
  }
  func.func @transform_4(%arg0: i32) -> (i32, i32) {
    %c0_i32 = arith.constant 0 : i32
    %c0_i32_0 = arith.constant 0 : i32
    %c0_i32_1 = arith.constant 0 : i32
    return %c0_i32, %c0_i32_0 : i32, i32
  }
  func.func @transform_5(%arg0: i32) -> (i32, i32) {
    %c0_i32 = arith.constant 0 : i32
    %c0_i32_0 = arith.constant 0 : i32
    return %arg0, %c0_i32 : i32, i32
  }
}

</mosaic_0001>

<llo_original>
// kernel: fully_connected.1
$region0: #{fully_connected.1}
  #allocation0 [shape = 'u32[]', space=smem, size = 0x4, offset = 0x4, fixed_abs, tag = 'smem constant byte address 0x4 - core index']
  #allocation1 [shape = 'u32[144,128]{1,0:T(1,128)}', space=vmem, size = 0x12000, scoped, tag = 'internal scratch']
  %s0 = inlined_call_operand.vmem [shape: f32[8,32], index: 0, kind: input, shape index: {}]
  %s1 = inlined_call_operand.vmem [shape: f32[32,512], index: 1, kind: input, shape index: {}]
  %s2 = inlined_call_operand.vmem [shape: f32[1,512], index: 2, kind: input, shape index: {}]
  %s3 = inlined_call_operand.vmem [shape: f32[512,128], index: 3, kind: input, shape index: {}]
  %s4 = inlined_call_operand.vmem [shape: f32[1,128], index: 4, kind: input, shape index: {}]
  %s5 = inlined_call_operand.vmem [shape: f32[8,128], index: 5, kind: output, shape index: {}]
  %s6 = sld [smem:[#allocation0]]
  $region30: #{fully_connected.1} parent=0
    _
  %s8 = ssub.s32 1, %s6
  %s9 = scalar_select 0, %s8, %s6
  // Predicated region
  $region2: #{fully_connected.1} parent=0 // pred_check
    _
  $region3: #{fully_connected.1} parent=0 // pred_check_branch
    %11 = sbr.rel (0) target = $region5
  $region4: #{fully_connected.1} parent=0 // pred_region
    _
  $region5: #{fully_connected.1} parent=0 // pred_fallthru
    _
  // Predicated region
  $region6: #{fully_connected.1} parent=0 // pred_check
    _
  $region7: #{fully_connected.1} parent=0 // pred_check_branch
    %13 = sbr.rel (0) target = $region9
  $region8: #{fully_connected.1} parent=0 // pred_region
    _
  $region9: #{fully_connected.1} parent=0 // pred_fallthru
    _
  // Predicated region
  $region10: #{fully_connected.1} parent=0 // pred_check
    _
  $region11: #{fully_connected.1} parent=0 // pred_check_branch
    %15 = sbr.rel (0) target = $region13
  $region12: #{fully_connected.1} parent=0 // pred_region
    _
  $region13: #{fully_connected.1} parent=0 // pred_fallthru
    _
  // Predicated region
  $region14: #{fully_connected.1} parent=0 // pred_check
    _
  $region15: #{fully_connected.1} parent=0 // pred_check_branch
    %17 = sbr.rel (0) target = $region17
  $region16: #{fully_connected.1} parent=0 // pred_region
    _
  $region17: #{fully_connected.1} parent=0 // pred_fallthru
    _
  // Predicated region
  $region18: #{fully_connected.1} parent=0 // pred_check
    _
  $region19: #{fully_connected.1} parent=0 // pred_check_branch
    %19 = sbr.rel (0) target = $region21
  $region20: #{fully_connected.1} parent=0 // pred_region
    _
  $region21: #{fully_connected.1} parent=0 // pred_fallthru
    _
  %v20 = vld [vmem:[%s0] sm:$0xff]
  %v21 = vld [vmem:[%s1] sm:$0xff]
  %v22 = vld [vmem:[%s1 + $0x8] sm:$0xff]
  %v23 = vld [vmem:[%s1 + $0x10] sm:$0xff]
  %v24 = vld [vmem:[%s1 + $0x18] sm:$0xff]
  %v25 = vld [vmem:[%s1 + $0x20] sm:$0xff]
  %v26 = vld [vmem:[%s1 + $0x28] sm:$0xff]
  %v27 = vld [vmem:[%s1 + $0x30] sm:$0xff]
  %v28 = vld [vmem:[%s1 + $0x38] sm:$0xff]
  %v29 = vld [vmem:[%s1 + $0x40] sm:$0xff]
  %v30 = vld [vmem:[%s1 + $0x48] sm:$0xff]
  %v31 = vld [vmem:[%s1 + $0x50] sm:$0xff]
  %v32 = vld [vmem:[%s1 + $0x58] sm:$0xff]
  %v33 = vld [vmem:[%s1 + $0x60] sm:$0xff]
  %v34 = vld [vmem:[%s1 + $0x68] sm:$0xff]
  %v35 = vld [vmem:[%s1 + $0x70] sm:$0xff]
  %v36 = vld [vmem:[%s1 + $0x78] sm:$0xff]
  %v37 = vld [vmem:[%s2] sm:$0xf]
  %v39 = vlaneseq
  %v40 = vshrl.u32 %v39, 7
  %v41 = vsub.s32 0, %v40
  %v42 = vrot.slane %v37, %v41
  %v43 = vlaneseq
  %v44 = vshrl.u32 %v43, 7
  %v45 = vsub.s32 1, %v44
  %v46 = vrot.slane %v37, %v45
  %v47 = vlaneseq
  %v48 = vshrl.u32 %v47, 7
  %v49 = vsub.s32 2, %v48
  %v50 = vrot.slane %v37, %v49
  %v51 = vlaneseq
  %v52 = vshrl.u32 %v51, 7
  %v53 = vsub.s32 3, %v52
  %v54 = vrot.slane %v37, %v53
  %vm59 = vcmask 261120
  %v61 = vsel %vm59, %v20, 0
  %63 = vmatprep.subr.mxu0 %v22
  %64 = vmatpush1.msra.mxu0 %v21
  %65 = vmatprep.subr.mxu0 %v26
  %66 = vmatpush1.msra.mxu0 %v25
  %67 = vmatprep.subr.mxu0 %v30
  %68 = vmatpush1.msra.mxu0 %v29
  %69 = vmatprep.subr.mxu0 %v34
  %70 = vmatpush1.msra.mxu0 %v33
  %71 = vmatprep.subr.mxu0 0.0
  %72 = vmatpush1.msra.mxu0 0.0
  %73 = vmatprep.subr.mxu0 0.0
  %74 = vmatpush1.msra.mxu0 0.0
  %75 = vmatprep.subr.mxu0 0.0
  %76 = vmatpush1.msra.mxu0 0.0
  %77 = vmatprep.subr.mxu0 0.0
  %78 = vmatpush1.msra.mxu0 0.0
  %79 = vmatprep.subr.mxu0 0.0
  %80 = vmatpush1.msra.mxu0 0.0
  %81 = vmatprep.subr.mxu0 0.0
  %82 = vmatpush1.msra.mxu0 0.0
  %83 = vmatprep.subr.mxu0 0.0
  %84 = vmatpush1.msra.mxu0 0.0
  %85 = vmatprep.subr.mxu0 0.0
  %86 = vmatpush1.msra.mxu0 0.0
  %87 = vmatprep.subr.mxu0 0.0
  %88 = vmatpush1.msra.mxu0 0.0
  %89 = vmatprep.subr.mxu0 0.0
  %90 = vmatpush1.msra.mxu0 0.0
  %91 = vmatprep.subr.mxu0 0.0
  %92 = vmatpush1.msra.mxu0 0.0
  %93 = vmatprep.subr.mxu0 0.0
  %94 = vmatpush1.msra.mxu0 0.0
  %95 = vmatprep.subr.mxu0 0.0
  %96 = vmatpush1.msra.mxu0 0.0
  %97 = vmatprep.subr.mxu0 0.0
  %98 = vmatpush1.msra.mxu0 0.0
  %99 = vmatprep.subr.mxu0 0.0
  %100 = vmatpush1.msra.mxu0 0.0
  %101 = vmatprep.subr.mxu0 0.0
  %102 = vmatpush1.msra.mxu0 0.0
  %103 = vmatprep.subr.mxu0 0.0
  %104 = vmatpush1.msra.mxu0 0.0
  %105 = vmatprep.subr.mxu0 0.0
  %106 = vmatpush1.msra.mxu0 0.0
  %107 = vmatprep.subr.mxu0 0.0
  %108 = vmatpush1.msra.mxu0 0.0
  %109 = vmatprep.subr.mxu0 0.0
  %110 = vmatpush1.msra.mxu0 0.0
  %111 = vmatprep.subr.mxu0 0.0
  %112 = vmatpush1.msra.mxu0 0.0
  %113 = vmatprep.subr.mxu0 0.0
  %114 = vmatpush1.msra.mxu0 0.0
  %115 = vmatprep.subr.mxu0 0.0
  %116 = vmatpush1.msra.mxu0 0.0
  %117 = vmatprep.subr.mxu0 0.0
  %118 = vmatpush1.msra.mxu0 0.0
  %119 = vmatprep.subr.mxu0 0.0
  %120 = vmatpush1.msra.mxu0 0.0
  %121 = vmatprep.subr.mxu0 0.0
  %122 = vmatpush1.msra.mxu0 0.0
  %123 = vmatprep.subr.mxu0 0.0
  %124 = vmatpush1.msra.mxu0 0.0
  %125 = vmatprep.subr.mxu0 0.0
  %126 = vmatpush1.msra.mxu0 0.0
  %127 = vmatprep.mubr.f32.mxu0 0.0
  %128 = vmatmul.mubr.f32.gmra.mrb[0].mxu0 %v61
  %v129 = vpop.f32.mrb[0].mxu0
  %v130 = vadd.f32 %v42, %v129
  %v131 = vpop.f32.mrb[0].mxu0
  %v132 = vadd.f32 %v46, %v131
  %133 = vdwg.mxu0
  %134 = vmatprep.subr.mxu0 %v24
  %135 = vmatpush1.msra.mxu0 %v23
  %136 = vmatprep.subr.mxu0 %v28
  %137 = vmatpush1.msra.mxu0 %v27
  %138 = vmatprep.subr.mxu0 %v32
  %139 = vmatpush1.msra.mxu0 %v31
  %140 = vmatprep.subr.mxu0 %v36
  %141 = vmatpush1.msra.mxu0 %v35
  %142 = vmatprep.subr.mxu0 0.0
  %143 = vmatpush1.msra.mxu0 0.0
  %144 = vmatprep.subr.mxu0 0.0
  %145 = vmatpush1.msra.mxu0 0.0
  %146 = vmatprep.subr.mxu0 0.0
  %147 = vmatpush1.msra.mxu0 0.0
  %148 = vmatprep.subr.mxu0 0.0
  %149 = vmatpush1.msra.mxu0 0.0
  %150 = vmatprep.subr.mxu0 0.0
  %151 = vmatpush1.msra.mxu0 0.0
  %152 = vmatprep.subr.mxu0 0.0
  %153 = vmatpush1.msra.mxu0 0.0
  %154 = vmatprep.subr.mxu0 0.0
  %155 = vmatpush1.msra.mxu0 0.0
  %156 = vmatprep.subr.mxu0 0.0
  %157 = vmatpush1.msra.mxu0 0.0
  %158 = vmatprep.subr.mxu0 0.0
  %159 = vmatpush1.msra.mxu0 0.0
  %160 = vmatprep.subr.mxu0 0.0
  %161 = vmatpush1.msra.mxu0 0.0
  %162 = vmatprep.subr.mxu0 0.0
  %163 = vmatpush1.msra.mxu0 0.0
  %164 = vmatprep.subr.mxu0 0.0
  %165 = vmatpush1.msra.mxu0 0.0
  %166 = vmatprep.subr.mxu0 0.0
  %167 = vmatpush1.msra.mxu0 0.0
  %168 = vmatprep.subr.mxu0 0.0
  %169 = vmatpush1.msra.mxu0 0.0
  %170 = vmatprep.subr.mxu0 0.0
  %171 = vmatpush1.msra.mxu0 0.0
  %172 = vmatprep.subr.mxu0 0.0
  %173 = vmatpush1.msra.mxu0 0.0
  %174 = vmatprep.subr.mxu0 0.0
  %175 = vmatpush1.msra.mxu0 0.0
  %176 = vmatprep.subr.mxu0 0.0
  %177 = vmatpush1.msra.mxu0 0.0
  %178 = vmatprep.subr.mxu0 0.0
  %179 = vmatpush1.msra.mxu0 0.0
  %180 = vmatprep.subr.mxu0 0.0
  %181 = vmatpush1.msra.mxu0 0.0
  %182 = vmatprep.subr.mxu0 0.0
  %183 = vmatpush1.msra.mxu0 0.0
  %184 = vmatprep.subr.mxu0 0.0
  %185 = vmatpush1.msra.mxu0 0.0
  %186 = vmatprep.subr.mxu0 0.0
  %187 = vmatpush1.msra.mxu0 0.0
  %188 = vmatprep.subr.mxu0 0.0
  %189 = vmatpush1.msra.mxu0 0.0
  %190 = vmatprep.subr.mxu0 0.0
  %191 = vmatpush1.msra.mxu0 0.0
  %192 = vmatprep.subr.mxu0 0.0
  %193 = vmatpush1.msra.mxu0 0.0
  %194 = vmatprep.subr.mxu0 0.0
  %195 = vmatpush1.msra.mxu0 0.0
  %196 = vmatprep.subr.mxu0 0.0
  %197 = vmatpush1.msra.mxu0 0.0
  %198 = vmatprep.mubr.f32.mxu0 0.0
  %199 = vmatmul.mubr.f32.gmra.mrb[0].mxu0 %v61
  %v200 = vpop.f32.mrb[0].mxu0
  %v201 = vadd.f32 %v50, %v200
  %v202 = vpop.f32.mrb[0].mxu0
  %v203 = vadd.f32 %v54, %v202
  %204 = vdwg.mxu0
  %v205 = vmax.f32 %v130, 0.0
  %v206 = vmax.f32 %v132, 0.0
  %v207 = vmax.f32 %v201, 0.0
  %v208 = vmax.f32 %v203, 0.0
  %v209 = vld [vmem:[%s3] sm:$0xff]
  %v210 = vld [vmem:[%s3 + $0x8] sm:$0xff]
  %v211 = vld [vmem:[%s3 + $0x10] sm:$0xff]
  %v212 = vld [vmem:[%s3 + $0x18] sm:$0xff]
  %v213 = vld [vmem:[%s3 + $0x20] sm:$0xff]
  %v214 = vld [vmem:[%s3 + $0x28] sm:$0xff]
  %v215 = vld [vmem:[%s3 + $0x30] sm:$0xff]
  %v216 = vld [vmem:[%s3 + $0x38] sm:$0xff]
  %v217 = vld [vmem:[%s3 + $0x40] sm:$0xff]
  %v218 = vld [vmem:[%s3 + $0x48] sm:$0xff]
  %v219 = vld [vmem:[%s3 + $0x50] sm:$0xff]
  %v220 = vld [vmem:[%s3 + $0x58] sm:$0xff]
  %v221 = vld [vmem:[%s3 + $0x60] sm:$0xff]
  %v222 = vld [vmem:[%s3 + $0x68] sm:$0xff]
  %v223 = vld [vmem:[%s3 + $0x70] sm:$0xff]
  %v224 = vld [vmem:[%s3 + $0x78] sm:$0xff]
  %v225 = vld [vmem:[%s3 + $0x80] sm:$0xff]
  %v226 = vld [vmem:[%s3 + $0x88] sm:$0xff]
  %v227 = vld [vmem:[%s3 + $0x90] sm:$0xff]
  %v228 = vld [vmem:[%s3 + $0x98] sm:$0xff]
  %v229 = vld [vmem:[%s3 + $0xa0] sm:$0xff]
  %v230 = vld [vmem:[%s3 + $0xa8] sm:$0xff]
  %v231 = vld [vmem:[%s3 + $0xb0] sm:$0xff]
  %v232 = vld [vmem:[%s3 + $0xb8] sm:$0xff]
  %v233 = vld [vmem:[%s3 + $0xc0] sm:$0xff]
  %v234 = vld [vmem:[%s3 + $0xc8] sm:$0xff]
  %v235 = vld [vmem:[%s3 + $0xd0] sm:$0xff]
  %v236 = vld [vmem:[%s3 + $0xd8] sm:$0xff]
  %v237 = vld [vmem:[%s3 + $0xe0] sm:$0xff]
  %v238 = vld [vmem:[%s3 + $0xe8] sm:$0xff]
  %v239 = vld [vmem:[%s3 + $0xf0] sm:$0xff]
  %v240 = vld [vmem:[%s3 + $0xf8] sm:$0xff]
  %v241 = vld [vmem:[%s3 + $0x100] sm:$0xff]
  %v242 = vld [vmem:[%s3 + $0x108] sm:$0xff]
  %v243 = vld [vmem:[%s3 + $0x110] sm:$0xff]
  %v244 = vld [vmem:[%s3 + $0x118] sm:$0xff]
  %v245 = vld [vmem:[%s3 + $0x120] sm:$0xff]
  %v246 = vld [vmem:[%s3 + $0x128] sm:$0xff]
  %v247 = vld [vmem:[%s3 + $0x130] sm:$0xff]
  %v248 = vld [vmem:[%s3 + $0x138] sm:$0xff]
  %v249 = vld [vmem:[%s3 + $0x140] sm:$0xff]
  %v250 = vld [vmem:[%s3 + $0x148] sm:$0xff]
  %v251 = vld [vmem:[%s3 + $0x150] sm:$0xff]
  %v252 = vld [vmem:[%s3 + $0x158] sm:$0xff]
  %v253 = vld [vmem:[%s3 + $0x160] sm:$0xff]
  %v254 = vld [vmem:[%s3 + $0x168] sm:$0xff]
  %v255 = vld [vmem:[%s3 + $0x170] sm:$0xff]
  %v256 = vld [vmem:[%s3 + $0x178] sm:$0xff]
  %v257 = vld [vmem:[%s3 + $0x180] sm:$0xff]
  %v258 = vld [vmem:[%s3 + $0x188] sm:$0xff]
  %v259 = vld [vmem:[%s3 + $0x190] sm:$0xff]
  %v260 = vld [vmem:[%s3 + $0x198] sm:$0xff]
  %v261 = vld [vmem:[%s3 + $0x1a0] sm:$0xff]
  %v262 = vld [vmem:[%s3 + $0x1a8] sm:$0xff]
  %v263 = vld [vmem:[%s3 + $0x1b0] sm:$0xff]
  %v264 = vld [vmem:[%s3 + $0x1b8] sm:$0xff]
  %v265 = vld [vmem:[%s3 + $0x1c0] sm:$0xff]
  %v266 = vld [vmem:[%s3 + $0x1c8] sm:$0xff]
  %v267 = vld [vmem:[%s3 + $0x1d0] sm:$0xff]
  %v268 = vld [vmem:[%s3 + $0x1d8] sm:$0xff]
  %v269 = vld [vmem:[%s3 + $0x1e0] sm:$0xff]
  %v270 = vld [vmem:[%s3 + $0x1e8] sm:$0xff]
  %v271 = vld [vmem:[%s3 + $0x1f0] sm:$0xff]
  %v272 = vld [vmem:[%s3 + $0x1f8] sm:$0xff]
  %v273 = vld [vmem:[%s4] sm:$0x1]
  %v275 = vlaneseq
  %v276 = vshrl.u32 %v275, 7
  %v277 = vsub.s32 0, %v276
  %v278 = vrot.slane %v273, %v277
  %280 = vmatprep.subr.mxu0 0.0
  %281 = vmatpush1.msra.mxu0 %v209
  %282 = vmatprep.subr.mxu0 0.0
  %283 = vmatpush1.msra.mxu0 %v210
  %284 = vmatprep.subr.mxu0 0.0
  %285 = vmatpush1.msra.mxu0 %v211
  %286 = vmatprep.subr.mxu0 0.0
  %287 = vmatpush1.msra.mxu0 %v212
  %288 = vmatprep.subr.mxu0 0.0
  %289 = vmatpush1.msra.mxu0 %v213
  %290 = vmatprep.subr.mxu0 0.0
  %291 = vmatpush1.msra.mxu0 %v214
  %292 = vmatprep.subr.mxu0 0.0
  %293 = vmatpush1.msra.mxu0 %v215
  %294 = vmatprep.subr.mxu0 0.0
  %295 = vmatpush1.msra.mxu0 %v216
  %296 = vmatprep.subr.mxu0 0.0
  %297 = vmatpush1.msra.mxu0 %v217
  %298 = vmatprep.subr.mxu0 0.0
  %299 = vmatpush1.msra.mxu0 %v218
  %300 = vmatprep.subr.mxu0 0.0
  %301 = vmatpush1.msra.mxu0 %v219
  %302 = vmatprep.subr.mxu0 0.0
  %303 = vmatpush1.msra.mxu0 %v220
  %304 = vmatprep.subr.mxu0 0.0
  %305 = vmatpush1.msra.mxu0 %v221
  %306 = vmatprep.subr.mxu0 0.0
  %307 = vmatpush1.msra.mxu0 %v222
  %308 = vmatprep.subr.mxu0 0.0
  %309 = vmatpush1.msra.mxu0 %v223
  %310 = vmatprep.subr.mxu0 0.0
  %311 = vmatpush1.msra.mxu0 %v224
  %312 = vmatprep.subr.mxu0 0.0
  %313 = vmatpush1.msra.mxu0 %v225
  %314 = vmatprep.subr.mxu0 0.0
  %315 = vmatpush1.msra.mxu0 %v226
  %316 = vmatprep.subr.mxu0 0.0
  %317 = vmatpush1.msra.mxu0 %v227
  %318 = vmatprep.subr.mxu0 0.0
  %319 = vmatpush1.msra.mxu0 %v228
  %320 = vmatprep.subr.mxu0 0.0
  %321 = vmatpush1.msra.mxu0 %v229
  %322 = vmatprep.subr.mxu0 0.0
  %323 = vmatpush1.msra.mxu0 %v230
  %324 = vmatprep.subr.mxu0 0.0
  %325 = vmatpush1.msra.mxu0 %v231
  %326 = vmatprep.subr.mxu0 0.0
  %327 = vmatpush1.msra.mxu0 %v232
  %328 = vmatprep.subr.mxu0 0.0
  %329 = vmatpush1.msra.mxu0 %v233
  %330 = vmatprep.subr.mxu0 0.0
  %331 = vmatpush1.msra.mxu0 %v234
  %332 = vmatprep.subr.mxu0 0.0
  %333 = vmatpush1.msra.mxu0 %v235
  %334 = vmatprep.subr.mxu0 0.0
  %335 = vmatpush1.msra.mxu0 %v236
  %336 = vmatprep.subr.mxu0 0.0
  %337 = vmatpush1.msra.mxu0 %v237
  %338 = vmatprep.subr.mxu0 0.0
  %339 = vmatpush1.msra.mxu0 %v238
  %340 = vmatprep.subr.mxu0 0.0
  %341 = vmatpush1.msra.mxu0 %v239
  %342 = vmatprep.subr.mxu0 0.0
  %343 = vmatpush1.msra.mxu0 %v240
  %344 = vmatprep.mubr.f32.mxu0 %v206
  %345 = vmatmul.mubr.f32.gmra.mrb[0].mxu0 %v205
  %v346 = vpop.f32.mrb[0].mxu0
  %v347 = vadd.f32 %v278, %v346
  %v348 = vpop.f32.mrb[0].mxu0
  %349 = vdwg.mxu0
  %350 = vmatprep.subr.mxu0 0.0
  %351 = vmatpush1.msra.mxu0 %v241
  %352 = vmatprep.subr.mxu0 0.0
  %353 = vmatpush1.msra.mxu0 %v242
  %354 = vmatprep.subr.mxu0 0.0
  %355 = vmatpush1.msra.mxu0 %v243
  %356 = vmatprep.subr.mxu0 0.0
  %357 = vmatpush1.msra.mxu0 %v244
  %358 = vmatprep.subr.mxu0 0.0
  %359 = vmatpush1.msra.mxu0 %v245
  %360 = vmatprep.subr.mxu0 0.0
  %361 = vmatpush1.msra.mxu0 %v246
  %362 = vmatprep.subr.mxu0 0.0
  %363 = vmatpush1.msra.mxu0 %v247
  %364 = vmatprep.subr.mxu0 0.0
  %365 = vmatpush1.msra.mxu0 %v248
  %366 = vmatprep.subr.mxu0 0.0
  %367 = vmatpush1.msra.mxu0 %v249
  %368 = vmatprep.subr.mxu0 0.0
  %369 = vmatpush1.msra.mxu0 %v250
  %370 = vmatprep.subr.mxu0 0.0
  %371 = vmatpush1.msra.mxu0 %v251
  %372 = vmatprep.subr.mxu0 0.0
  %373 = vmatpush1.msra.mxu0 %v252
  %374 = vmatprep.subr.mxu0 0.0
  %375 = vmatpush1.msra.mxu0 %v253
  %376 = vmatprep.subr.mxu0 0.0
  %377 = vmatpush1.msra.mxu0 %v254
  %378 = vmatprep.subr.mxu0 0.0
  %379 = vmatpush1.msra.mxu0 %v255
  %380 = vmatprep.subr.mxu0 0.0
  %381 = vmatpush1.msra.mxu0 %v256
  %382 = vmatprep.subr.mxu0 0.0
  %383 = vmatpush1.msra.mxu0 %v257
  %384 = vmatprep.subr.mxu0 0.0
  %385 = vmatpush1.msra.mxu0 %v258
  %386 = vmatprep.subr.mxu0 0.0
  %387 = vmatpush1.msra.mxu0 %v259
  %388 = vmatprep.subr.mxu0 0.0
  %389 = vmatpush1.msra.mxu0 %v260
  %390 = vmatprep.subr.mxu0 0.0
  %391 = vmatpush1.msra.mxu0 %v261
  %392 = vmatprep.subr.mxu0 0.0
  %393 = vmatpush1.msra.mxu0 %v262
  %394 = vmatprep.subr.mxu0 0.0
  %395 = vmatpush1.msra.mxu0 %v263
  %396 = vmatprep.subr.mxu0 0.0
  %397 = vmatpush1.msra.mxu0 %v264
  %398 = vmatprep.subr.mxu0 0.0
  %399 = vmatpush1.msra.mxu0 %v265
  %400 = vmatprep.subr.mxu0 0.0
  %401 = vmatpush1.msra.mxu0 %v266
  %402 = vmatprep.subr.mxu0 0.0
  %403 = vmatpush1.msra.mxu0 %v267
  %404 = vmatprep.subr.mxu0 0.0
  %405 = vmatpush1.msra.mxu0 %v268
  %406 = vmatprep.subr.mxu0 0.0
  %407 = vmatpush1.msra.mxu0 %v269
  %408 = vmatprep.subr.mxu0 0.0
  %409 = vmatpush1.msra.mxu0 %v270
  %410 = vmatprep.subr.mxu0 0.0
  %411 = vmatpush1.msra.mxu0 %v271
  %412 = vmatprep.subr.mxu0 0.0
  %413 = vmatpush1.msra.mxu0 %v272
  %414 = vmatprep.mubr.f32.mxu0 %v208
  %415 = vmatmul.mubr.f32.gmra.mrb[0].mxu0 %v207
  %v416 = vpop.f32.mrb[0].mxu0
  %v417 = vadd.f32 %v347, %v416
  %v418 = vpop.f32.mrb[0].mxu0
  %419 = vdwg.mxu0
  %420 = vst [vmem:[%s5] sm:$0xff] %v417
  // Predicated region
  $region22: #{fully_connected.1} parent=0 // pred_check
    _
  $region23: #{fully_connected.1} parent=0 // pred_check_branch
    %422 = sbr.rel (0) target = $region25
  $region24: #{fully_connected.1} parent=0 // pred_region
    _
  $region25: #{fully_connected.1} parent=0 // pred_fallthru
    _
  // Predicated region
  $region26: #{fully_connected.1} parent=0 // pred_check
    _
  $region27: #{fully_connected.1} parent=0 // pred_check_branch
    %424 = sbr.rel (0) target = $region29
  $region28: #{fully_connected.1} parent=0 // pred_region
    _
  $region29: #{fully_connected.1} parent=0 // pred_fallthru
    _

</llo_original>
